<compile_context>
chip_gen: v7x
topology: tpu7x:2x2x1
jax: 0.10.0
libtpu: 0.0.40
codegen_flags: <defaults>
</compile_context>

<pallas_src>
import functools

import jax
import jax.numpy as jnp
from jax.experimental import pallas as pl
from jax.experimental.pallas import tpu as pltpu

LANE = 128      # lane width: last dim of every block is a multiple of this
SUBLANE = 8     # sublane width: batch tiles are multiples of this


def _round_up(n, m):
    return ((n + m - 1) // m) * m


def mlp_kernel(x_ref, w1_ref, b1_ref, w2_ref, b2_ref, w3_ref, b3_ref,
               logit_ref, repr_ref):
    """One batch tile of the fused MLP.

    x tile: (TB, Ip) bf16; weights bf16 (in, out) layout; biases f32 (1, F).
    Matmuls accumulate in f32 on the MXU; bias + ReLU epilogues run in f32 on
    the VPU (free filler slots while the MXU is busy).
    """
    x = x_ref[...]                                           # (TB, Ip) bf16

    # fc1 + bias + ReLU  -> representation (dropout identity in eval mode)
    h1 = jnp.dot(x, w1_ref[...], preferred_element_type=jnp.float32)
    h1 = jnp.maximum(h1 + b1_ref[...], 0.0)                  # (TB, Hp) f32
    repr_ref[...] = h1.astype(repr_ref.dtype)

    # fc2 + bias + ReLU (dropout identity)
    h2 = jnp.dot(h1.astype(w2_ref.dtype), w2_ref[...],
                 preferred_element_type=jnp.float32)
    h2 = jnp.maximum(h2 + b2_ref[...], 0.0)                  # (TB, Hp) f32

    # fc3 -> logits
    logit = jnp.dot(h2.astype(w3_ref.dtype), w3_ref[...],
                    preferred_element_type=jnp.float32)
    logit_ref[...] = (logit + b3_ref[...]).astype(logit_ref.dtype)


@functools.partial(jax.jit, static_argnames=("block_b", "matmul_dtype"))
def mlp_forward(x, params, *, block_b=256, matmul_dtype=jnp.bfloat16):
    """x: (B, input_size) float32. params: dict of weights/biases (in, out).

    Returns (logit, representation) exactly like Net.forward (eval mode).
    """
    w1, b1, w2, b2, w3, b3 = (params["w1"], params["b1"], params["w2"],
                              params["b2"], params["w3"], params["b3"])
    B, I = x.shape
    H = w1.shape[1]
    C = w3.shape[1]

    # --- lane-pad feature dims to 128, sublane-pad batch to the tile size ---
    Ip = _round_up(I, LANE)
    Hp = _round_up(H, LANE)
    Cp = _round_up(C, LANE)
    TB = min(_round_up(B, SUBLANE), _round_up(block_b, SUBLANE))
    Bp = _round_up(B, TB)

    md = jnp.dtype(matmul_dtype)
    xp = jnp.zeros((Bp, Ip), md).at[:B, :I].set(x.astype(md))
    w1p = jnp.zeros((Ip, Hp), md).at[:I, :H].set(w1.astype(md))
    w2p = jnp.zeros((Hp, Hp), md).at[:H, :H].set(w2.astype(md))
    w3p = jnp.zeros((Hp, Cp), md).at[:H, :C].set(w3.astype(md))
    b1p = jnp.zeros((1, Hp), jnp.float32).at[:, :H].set(b1)
    b2p = jnp.zeros((1, Hp), jnp.float32).at[:, :H].set(b2)
    b3p = jnp.zeros((1, Cp), jnp.float32).at[:, :C].set(b3)

    grid = (Bp // TB,)

    # Weights/biases: constant index_map -> fetched once, VMEM-resident across
    # all batch tiles.  x/outputs: tiled over the batch grid axis.
    const2d = lambda i: (0, 0)
    batched = lambda i: (i, 0)
    in_specs = [
        pl.BlockSpec((TB, Ip), batched),       # x
        pl.BlockSpec((Ip, Hp), const2d),       # w1
        pl.BlockSpec((1, Hp), const2d),        # b1
        pl.BlockSpec((Hp, Hp), const2d),       # w2
        pl.BlockSpec((1, Hp), const2d),        # b2
        pl.BlockSpec((Hp, Cp), const2d),       # w3
        pl.BlockSpec((1, Cp), const2d),        # b3
    ]
    out_specs = (
        pl.BlockSpec((TB, Cp), batched),       # logits (lane-dense, padded)
        pl.BlockSpec((TB, Hp), batched),       # representation (lane-dense)
    )

    flops = 2 * Bp * (Ip * Hp + Hp * Hp + Hp * Cp)
    bytes_accessed = (
        Bp * Ip * md.itemsize                              # x
        + (Ip * Hp + Hp * Hp + Hp * Cp) * md.itemsize      # weights
        + (Hp + Hp + Cp) * 4                               # biases
        + Bp * (Cp + Hp) * 4                               # outputs
    )

    logit_p, repr_p = pl.pallas_call(
        mlp_kernel,
        grid=grid,
        in_specs=in_specs,
        out_specs=out_specs,
        out_shape=(
            jax.ShapeDtypeStruct((Bp, Cp), jnp.float32),
            jax.ShapeDtypeStruct((Bp, Hp), jnp.float32),
        ),
        compiler_params=pltpu.CompilerParams(
            dimension_semantics=("parallel",)),
        cost_estimate=pl.CostEstimate(
            flops=flops, transcendentals=0, bytes_accessed=bytes_accessed),
    )(xp, w1p, b1p, w2p, b2p, w3p, b3p)

    # Slice the zero-padded lanes/rows back off.
    return logit_p[:B, :C], repr_p[:B, :H]


def init_params(key, input_size, hidden_size, num_classes):
    """Deterministic init mimicking nn.Linear: U(-1/sqrt(fan_in), 1/sqrt(fan_in)).

    Weights are stored transposed relative to PyTorch, i.e. (in, out).
    """
    ks = jax.random.split(key, 6)

    def linear(kw, kb, fan_in, fan_out):
        bound = 1.0 / jnp.sqrt(fan_in)
        w = jax.random.uniform(kw, (fan_in, fan_out), jnp.float32, -bound, bound)
        b = jax.random.uniform(kb, (1, fan_out), jnp.float32, -bound, bound)
        return w, b

    w1, b1 = linear(ks[0], ks[1], input_size, hidden_size)
    w2, b2 = linear(ks[2], ks[3], hidden_size, hidden_size)
    w3, b3 = linear(ks[4], ks[5], hidden_size, num_classes)
    return {"w1": w1, "b1": b1, "w2": w2, "b2": b2, "w3": w3, "b3": b3}


if __name__ == "__main__":
    input_size, hidden_size, num_classes = 64, 32, 16
    batch = 8

    key = jax.random.PRNGKey(0)
    k_x, k_p = jax.random.split(key)

    x = jax.random.normal(k_x, (batch, input_size), jnp.float32)
    params = init_params(k_p, input_size, hidden_size, num_classes)

    logit, representation = mlp_forward(x, params)
    jax.block_until_ready((logit, representation))

    # Reference check in plain JAX f32 (eval-mode dropout == identity).
    # Kernel matmuls use bf16 operands with f32 accumulation, so tolerances
    # are loosened accordingly.
    h1_ref = jnp.maximum(x @ params["w1"] + params["b1"], 0.0)
    h2_ref = jnp.maximum(h1_ref @ params["w2"] + params["b2"], 0.0)
    logit_ref = h2_ref @ params["w3"] + params["b3"]

    assert logit.shape == (batch, num_classes)
    assert representation.shape == (batch, hidden_size)
    assert jnp.allclose(logit, logit_ref, atol=5e-2, rtol=5e-2)
    assert jnp.allclose(representation, h1_ref, atol=5e-2, rtol=5e-2)

    print("KERNEL_OK")
</pallas_src>

<mosaic_0001>
module attributes {stable_mosaic.version = 11 : i64} {
  func.func @mlp_kernel(%arg0: i32, %arg1: memref<8x128xbf16, #tpu.memory_space<vmem>>, %arg2: memref<128x128xbf16, #tpu.memory_space<vmem>>, %arg3: memref<1x128xf32, #tpu.memory_space<vmem>>, %arg4: memref<128x128xbf16, #tpu.memory_space<vmem>>, %arg5: memref<1x128xf32, #tpu.memory_space<vmem>>, %arg6: memref<128x128xbf16, #tpu.memory_space<vmem>>, %arg7: memref<1x128xf32, #tpu.memory_space<vmem>>, %arg8: memref<8x128xf32, #tpu.memory_space<vmem>>, %arg9: memref<8x128xf32, #tpu.memory_space<vmem>>) attributes {dimension_semantics = [#tpu.dimension_semantics<parallel>], iteration_bounds = array<i64: 1>, scalar_prefetch = 0 : i64, scratch_operands = 0 : i64, tpu.core_type = #tpu.core_type<tc>, window_params = [{transform_indices = @transform_0, window_bounds = array<i64: 8, 128>}, {pipeline_mode = #tpu.pipeline_mode<synchronous>, transform_indices = @transform_1, window_bounds = array<i64: 128, 128>}, {pipeline_mode = #tpu.pipeline_mode<synchronous>, transform_indices = @transform_2, window_bounds = array<i64: 1, 128>}, {pipeline_mode = #tpu.pipeline_mode<synchronous>, transform_indices = @transform_3, window_bounds = array<i64: 128, 128>}, {pipeline_mode = #tpu.pipeline_mode<synchronous>, transform_indices = @transform_4, window_bounds = array<i64: 1, 128>}, {pipeline_mode = #tpu.pipeline_mode<synchronous>, transform_indices = @transform_5, window_bounds = array<i64: 128, 128>}, {pipeline_mode = #tpu.pipeline_mode<synchronous>, transform_indices = @transform_6, window_bounds = array<i64: 1, 128>}, {transform_indices = @transform_7, window_bounds = array<i64: 8, 128>}, {transform_indices = @transform_8, window_bounds = array<i64: 8, 128>}]} {
    %c0 = arith.constant 0 : index
    %c0_0 = arith.constant 0 : index
    %0 = vector.load %arg1[%c0, %c0_0] : memref<8x128xbf16, #tpu.memory_space<vmem>>, vector<8x128xbf16>
    %c0_1 = arith.constant 0 : index
    %c0_2 = arith.constant 0 : index
    %1 = vector.load %arg2[%c0_1, %c0_2] : memref<128x128xbf16, #tpu.memory_space<vmem>>, vector<128x128xbf16>
    %cst = arith.constant dense<0.000000e+00> : vector<8x128xf32>
    %2 = tpu.matmul %0, %1, %cst {dimension_numbers = #tpu.dot_dimension_numbers<[1], [0], [0], [1], [0, 0, 1, 1], [], []>} : vector<8x128xbf16>, vector<128x128xbf16>, vector<8x128xf32> -> vector<8x128xf32>
    %c0_3 = arith.constant 0 : index
    %c0_4 = arith.constant 0 : index
    %3 = vector.load %arg3[%c0_3, %c0_4] : memref<1x128xf32, #tpu.memory_space<vmem>>, vector<1x128xf32>
    %4 = vector.broadcast %3 : vector<1x128xf32> to vector<8x128xf32>
    %5 = arith.addf %2, %4 : vector<8x128xf32>
    %cst_5 = arith.constant 0.000000e+00 : f32
    %6 = vector.broadcast %cst_5 : f32 to vector<8x128xf32>
    %7 = arith.maximumf %5, %6 : vector<8x128xf32>
    %c0_6 = arith.constant 0 : index
    %c0_7 = arith.constant 0 : index
    %8 = vector.load %arg9[%c0_6, %c0_7] : memref<8x128xf32, #tpu.memory_space<vmem>>, vector<8x128xf32>
    tpu.vector_store %arg9[%c0_6, %c0_7], %7 {strides = array<i32>} : memref<8x128xf32, #tpu.memory_space<vmem>>, vector<8x128xf32>,
    %9 = arith.truncf %7 : vector<8x128xf32> to vector<8x128xbf16>
    %c0_8 = arith.constant 0 : index
    %c0_9 = arith.constant 0 : index
    %10 = vector.load %arg4[%c0_8, %c0_9] : memref<128x128xbf16, #tpu.memory_space<vmem>>, vector<128x128xbf16>
    %cst_10 = arith.constant dense<0.000000e+00> : vector<8x128xf32>
    %11 = tpu.matmul %9, %10, %cst_10 {dimension_numbers = #tpu.dot_dimension_numbers<[1], [0], [0], [1], [0, 0, 1, 1], [], []>} : vector<8x128xbf16>, vector<128x128xbf16>, vector<8x128xf32> -> vector<8x128xf32>
    %c0_11 = arith.constant 0 : index
    %c0_12 = arith.constant 0 : index
    %12 = vector.load %arg5[%c0_11, %c0_12] : memref<1x128xf32, #tpu.memory_space<vmem>>, vector<1x128xf32>
    %13 = vector.broadcast %12 : vector<1x128xf32> to vector<8x128xf32>
    %14 = arith.addf %11, %13 : vector<8x128xf32>
    %cst_13 = arith.constant 0.000000e+00 : f32
    %15 = vector.broadcast %cst_13 : f32 to vector<8x128xf32>
    %16 = arith.maximumf %14, %15 : vector<8x128xf32>
    %17 = arith.truncf %16 : vector<8x128xf32> to vector<8x128xbf16>
    %c0_14 = arith.constant 0 : index
    %c0_15 = arith.constant 0 : index
    %18 = vector.load %arg6[%c0_14, %c0_15] : memref<128x128xbf16, #tpu.memory_space<vmem>>, vector<128x128xbf16>
    %cst_16 = arith.constant dense<0.000000e+00> : vector<8x128xf32>
    %19 = tpu.matmul %17, %18, %cst_16 {dimension_numbers = #tpu.dot_dimension_numbers<[1], [0], [0], [1], [0, 0, 1, 1], [], []>} : vector<8x128xbf16>, vector<128x128xbf16>, vector<8x128xf32> -> vector<8x128xf32>
    %c0_17 = arith.constant 0 : index
    %c0_18 = arith.constant 0 : index
    %20 = vector.load %arg7[%c0_17, %c0_18] : memref<1x128xf32, #tpu.memory_space<vmem>>, vector<1x128xf32>
    %21 = vector.broadcast %20 : vector<1x128xf32> to vector<8x128xf32>
    %22 = arith.addf %19, %21 : vector<8x128xf32>
    %c0_19 = arith.constant 0 : index
    %c0_20 = arith.constant 0 : index
    %23 = vector.load %arg8[%c0_19, %c0_20] : memref<8x128xf32, #tpu.memory_space<vmem>>, vector<8x128xf32>
    tpu.vector_store %arg8[%c0_19, %c0_20], %22 {strides = array<i32>} : memref<8x128xf32, #tpu.memory_space<vmem>>, vector<8x128xf32>,
    return
  }
  func.func @transform_0(%arg0: i32) -> (i32, i32) {
    %c0_i32 = arith.constant 0 : i32
    %c0_i32_0 = arith.constant 0 : i32
    return %arg0, %c0_i32 : i32, i32
  }
  func.func @transform_1(%arg0: i32) -> (i32, i32) {
    %c0_i32 = arith.constant 0 : i32
    %c0_i32_0 = arith.constant 0 : i32
    %c0_i32_1 = arith.constant 0 : i32
    return %c0_i32, %c0_i32_0 : i32, i32
  }
  func.func @transform_2(%arg0: i32) -> (i32, i32) {
    %c0_i32 = arith.constant 0 : i32
    %c0_i32_0 = arith.constant 0 : i32
    %c0_i32_1 = arith.constant 0 : i32
    return %c0_i32, %c0_i32_0 : i32, i32
  }
  func.func @transform_3(%arg0: i32) -> (i32, i32) {
    %c0_i32 = arith.constant 0 : i32
    %c0_i32_0 = arith.constant 0 : i32
    %c0_i32_1 = arith.constant 0 : i32
    return %c0_i32, %c0_i32_0 : i32, i32
  }
  func.func @transform_4(%arg0: i32) -> (i32, i32) {
    %c0_i32 = arith.constant 0 : i32
    %c0_i32_0 = arith.constant 0 : i32
    %c0_i32_1 = arith.constant 0 : i32
    return %c0_i32, %c0_i32_0 : i32, i32
  }
  func.func @transform_5(%arg0: i32) -> (i32, i32) {
    %c0_i32 = arith.constant 0 : i32
    %c0_i32_0 = arith.constant 0 : i32
    %c0_i32_1 = arith.constant 0 : i32
    return %c0_i32, %c0_i32_0 : i32, i32
  }
  func.func @transform_6(%arg0: i32) -> (i32, i32) {
    %c0_i32 = arith.constant 0 : i32
    %c0_i32_0 = arith.constant 0 : i32
    %c0_i32_1 = arith.constant 0 : i32
    return %c0_i32, %c0_i32_0 : i32, i32
  }
  func.func @transform_7(%arg0: i32) -> (i32, i32) {
    %c0_i32 = arith.constant 0 : i32
    %c0_i32_0 = arith.constant 0 : i32
    return %arg0, %c0_i32 : i32, i32
  }
  func.func @transform_8(%arg0: i32) -> (i32, i32) {
    %c0_i32 = arith.constant 0 : i32
    %c0_i32_0 = arith.constant 0 : i32
    return %arg0, %c0_i32 : i32, i32
  }
}

</mosaic_0001>

<llo_original>
// kernel: mlp_forward.1
$region0: #{mlp_forward.1}
  #allocation0 [shape = 'u32[]', space=smem, size = 0x4, offset = 0x4, fixed_abs, tag = 'smem constant byte address 0x4 - core index']
  #allocation1 [shape = 'u32[144,128]{1,0:T(1,128)}', space=vmem, size = 0x12000, scoped, tag = 'internal scratch']
  %s0 = inlined_call_operand.vmem [shape: bf16[8,128], index: 0, kind: input, shape index: {}]
  %s1 = inlined_call_operand.vmem [shape: bf16[128,128], index: 1, kind: input, shape index: {}]
  %s2 = inlined_call_operand.vmem [shape: f32[1,128], index: 2, kind: input, shape index: {}]
  %s3 = inlined_call_operand.vmem [shape: bf16[128,128], index: 3, kind: input, shape index: {}]
  %s4 = inlined_call_operand.vmem [shape: f32[1,128], index: 4, kind: input, shape index: {}]
  %s5 = inlined_call_operand.vmem [shape: bf16[128,128], index: 5, kind: input, shape index: {}]
  %s6 = inlined_call_operand.vmem [shape: f32[1,128], index: 6, kind: input, shape index: {}]
  %s7 = inlined_call_operand.hbm [shape: f32[8,128], index: 7, kind: output, shape index: {0}]
  %s8 = inlined_call_operand.hbm [shape: f32[8,128], index: 8, kind: output, shape index: {1}]
  %9 = xla_tuple %s7, %s8
  %s10 = sld [smem:[#allocation0]]
  $region46: #{mlp_forward.1} parent=0
    _
  %s12 = ssub.s32 1, %s10
  %s13 = scalar_select 0, %s12, %s10
  $region1: #{mlp_forward.1} parent=0
    #allocation2 [shape = 'u8[4096]{0}', space=vmem, size = 0x1000, scoped, tag = 'output window, operand 0, single buffered']
    #allocation3 [shape = 's32[1]{0}', space=sflag, size = 0x4, scoped, tag = 'scoped memory for mlp_forward.1']
    #allocation4 [shape = 'u8[4096]{0}', space=vmem, size = 0x1000, scoped, tag = 'output window, operand 1, single buffered']
    #allocation5 [shape = 's32[1]{0}', space=sflag, size = 0x4, scoped, tag = 'scoped memory for mlp_forward.1']
    %14 = vsyncpa [#allocation3], 0
    %15 = vsyncpa [#allocation5], 0
    // Predicated region
    $region2: #{mlp_forward.1} parent=1 // pred_check
      _
    $region3: #{mlp_forward.1} parent=1 // pred_check_branch
      %17 = sbr.rel (0) target = $region5
    $region4: #{mlp_forward.1} parent=1 // pred_region
      _
    $region5: #{mlp_forward.1} parent=1 // pred_fallthru
      _
    // Predicated region
    $region6: #{mlp_forward.1} parent=1 // pred_check
      _
    $region7: #{mlp_forward.1} parent=1 // pred_check_branch
      %19 = sbr.rel (0) target = $region9
    $region8: #{mlp_forward.1} parent=1 // pred_region
      _
    $region9: #{mlp_forward.1} parent=1 // pred_fallthru
      _
    // Predicated region
    $region10: #{mlp_forward.1} parent=1 // pred_check
      _
    $region11: #{mlp_forward.1} parent=1 // pred_check_branch
      %21 = sbr.rel (0) target = $region13
    $region12: #{mlp_forward.1} parent=1 // pred_region
      _
    $region13: #{mlp_forward.1} parent=1 // pred_fallthru
      _
    // Predicated region
    $region14: #{mlp_forward.1} parent=1 // pred_check
      _
    $region15: #{mlp_forward.1} parent=1 // pred_check_branch
      %23 = sbr.rel (0) target = $region17
    $region16: #{mlp_forward.1} parent=1 // pred_region
      _
    $region17: #{mlp_forward.1} parent=1 // pred_fallthru
      _
    // Predicated region
    $region18: #{mlp_forward.1} parent=1 // pred_check
      _
    $region19: #{mlp_forward.1} parent=1 // pred_check_branch
      %25 = sbr.rel (0) target = $region21
    $region20: #{mlp_forward.1} parent=1 // pred_region
      _
    $region21: #{mlp_forward.1} parent=1 // pred_fallthru
      _
    // Predicated region
    $region22: #{mlp_forward.1} parent=1 // pred_check
      _
    $region23: #{mlp_forward.1} parent=1 // pred_check_branch
      %27 = sbr.rel (0) target = $region25
    $region24: #{mlp_forward.1} parent=1 // pred_region
      _
    $region25: #{mlp_forward.1} parent=1 // pred_fallthru
      _
    // Predicated region
    $region26: #{mlp_forward.1} parent=1 // pred_check
      _
    $region27: #{mlp_forward.1} parent=1 // pred_check_branch
      %29 = sbr.rel (0) target = $region29
    $region28: #{mlp_forward.1} parent=1 // pred_region
      _
    $region29: #{mlp_forward.1} parent=1 // pred_fallthru
      _
    %v31 = vld [vmem:[%s0] sm:$0xf]
    %v32 = vld [vmem:[%s1] sm:$0xf]
    %v33 = vld [vmem:[%s1 + $0x4] sm:$0xf]
    %v34 = vld [vmem:[%s1 + $0x8] sm:$0xf]
    %v35 = vld [vmem:[%s1 + $0xc] sm:$0xf]
    %v36 = vld [vmem:[%s1 + $0x10] sm:$0xf]
    %v37 = vld [vmem:[%s1 + $0x14] sm:$0xf]
    %v38 = vld [vmem:[%s1 + $0x18] sm:$0xf]
    %v39 = vld [vmem:[%s1 + $0x1c] sm:$0xf]
    %v40 = vld [vmem:[%s1 + $0x20] sm:$0xf]
    %v41 = vld [vmem:[%s1 + $0x24] sm:$0xf]
    %v42 = vld [vmem:[%s1 + $0x28] sm:$0xf]
    %v43 = vld [vmem:[%s1 + $0x2c] sm:$0xf]
    %v44 = vld [vmem:[%s1 + $0x30] sm:$0xf]
    %v45 = vld [vmem:[%s1 + $0x34] sm:$0xf]
    %v46 = vld [vmem:[%s1 + $0x38] sm:$0xf]
    %v47 = vld [vmem:[%s1 + $0x3c] sm:$0xf]
    %v48 = vld [vmem:[%s2] sm:$0x1]
    %v50 = vlaneseq
    %v51 = vshrl.u32 %v50, 7
    %v52 = vsub.s32 0, %v51
    %v53 = vrot.slane %v48, %v52
    %v71 = vunpack.c.l.b16 %v32
    %v72 = vunpack.c.l.b16 %v33
    %v73 = vunpack.c.l.b16 %v34
    %v74 = vunpack.c.l.b16 %v35
    %v75 = vunpack.c.l.b16 %v36
    %v76 = vunpack.c.l.b16 %v37
    %v77 = vunpack.c.l.b16 %v38
    %v78 = vunpack.c.l.b16 %v39
    %v79 = vunpack.c.l.b16 %v40
    %v80 = vunpack.c.l.b16 %v41
    %v81 = vunpack.c.l.b16 %v42
    %v82 = vunpack.c.l.b16 %v43
    %v83 = vunpack.c.l.b16 %v44
    %v84 = vunpack.c.l.b16 %v45
    %v85 = vunpack.c.l.b16 %v46
    %v86 = vunpack.c.l.b16 %v47
    %v87 = vpack.c.b16 %v72, %v71
    %v88 = vpack.c.b16 %v74, %v73
    %v89 = vpack.c.b16 %v76, %v75
    %v90 = vpack.c.b16 %v78, %v77
    %v91 = vpack.c.b16 %v80, %v79
    %v92 = vpack.c.b16 %v82, %v81
    %v93 = vpack.c.b16 %v84, %v83
    %v94 = vpack.c.b16 %v86, %v85
    %103 = vmatprep.subr.bf16.mxu0 0
    %104 = vmatpush1.bf16.msra.mxu0 %v87
    %105 = vmatprep.subr.bf16.mxu0 0
    %106 = vmatpush1.bf16.msra.mxu0 %v88
    %107 = vmatprep.subr.bf16.mxu0 0
    %108 = vmatpush1.bf16.msra.mxu0 %v89
    %109 = vmatprep.subr.bf16.mxu0 0
    %110 = vmatpush1.bf16.msra.mxu0 %v90
    %111 = vmatprep.subr.bf16.mxu0 0
    %112 = vmatpush1.bf16.msra.mxu0 %v91
    %113 = vmatprep.subr.bf16.mxu0 0
    %114 = vmatpush1.bf16.msra.mxu0 %v92
    %115 = vmatprep.subr.bf16.mxu0 0
    %116 = vmatpush1.bf16.msra.mxu0 %v93
    %117 = vmatprep.subr.bf16.mxu0 0
    %118 = vmatpush1.bf16.msra.mxu0 %v94
    %119 = vmatprep.subr.bf16.mxu0 0
    %120 = vmatpush1.bf16.msra.mxu0 0
    %121 = vmatprep.subr.bf16.mxu0 0
    %122 = vmatpush1.bf16.msra.mxu0 0
    %123 = vmatprep.subr.bf16.mxu0 0
    %124 = vmatpush1.bf16.msra.mxu0 0
    %125 = vmatprep.subr.bf16.mxu0 0
    %126 = vmatpush1.bf16.msra.mxu0 0
    %127 = vmatprep.subr.bf16.mxu0 0
    %128 = vmatpush1.bf16.msra.mxu0 0
    %129 = vmatprep.subr.bf16.mxu0 0
    %130 = vmatpush1.bf16.msra.mxu0 0
    %131 = vmatprep.subr.bf16.mxu0 0
    %132 = vmatpush1.bf16.msra.mxu0 0
    %133 = vmatprep.subr.bf16.mxu0 0
    %134 = vmatpush1.bf16.msra.mxu0 0
    %135 = vmatprep.mubr.bf16.mxu0 0
    %136 = vmatmul.mubr.bf16.gmra.mrb[0].mxu0 %v31
    %v137 = vpop.f32.mrb[0].mxu0
    %v138 = vadd.f32 %v53, %v137
    %v139 = vpop.f32.mrb[0].mxu0
    %v140 = vpop.f32.mrb[0].mxu0
    %v141 = vpop.f32.mrb[0].mxu0
    %142 = vdwg.mxu0
    %v143 = vmax.f32 %v138, 0.0
    %144 = vst [vmem:[#allocation4] sm:$0xff] %v143
    %v145 = vpack.c.bf16 %v143, %v143
    %v146 = vld [vmem:[%s3] sm:$0xf]
    %v147 = vld [vmem:[%s3 + $0x4] sm:$0xf]
    %v148 = vld [vmem:[%s3 + $0x8] sm:$0xf]
    %v149 = vld [vmem:[%s3 + $0xc] sm:$0xf]
    %v150 = vld [vmem:[%s3 + $0x10] sm:$0xf]
    %v151 = vld [vmem:[%s3 + $0x14] sm:$0xf]
    %v152 = vld [vmem:[%s3 + $0x18] sm:$0xf]
    %v153 = vld [vmem:[%s3 + $0x1c] sm:$0xf]
    %v154 = vld [vmem:[%s3 + $0x20] sm:$0xf]
    %v155 = vld [vmem:[%s3 + $0x24] sm:$0xf]
    %v156 = vld [vmem:[%s3 + $0x28] sm:$0xf]
    %v157 = vld [vmem:[%s3 + $0x2c] sm:$0xf]
    %v158 = vld [vmem:[%s3 + $0x30] sm:$0xf]
    %v159 = vld [vmem:[%s3 + $0x34] sm:$0xf]
    %v160 = vld [vmem:[%s3 + $0x38] sm:$0xf]
    %v161 = vld [vmem:[%s3 + $0x3c] sm:$0xf]
    %v162 = vld [vmem:[%s4] sm:$0x1]
    %v164 = vlaneseq
    %v165 = vshrl.u32 %v164, 7
    %v166 = vsub.s32 0, %v165
    %v167 = vrot.slane %v162, %v166
    %v185 = vunpack.c.l.b16 %v146
    %v186 = vunpack.c.l.b16 %v147
    %v187 = vunpack.c.l.b16 %v148
    %v188 = vunpack.c.l.b16 %v149
    %v189 = vunpack.c.l.b16 %v150
    %v190 = vunpack.c.l.b16 %v151
    %v191 = vunpack.c.l.b16 %v152
    %v192 = vunpack.c.l.b16 %v153
    %v193 = vunpack.c.l.b16 %v154
    %v194 = vunpack.c.l.b16 %v155
    %v195 = vunpack.c.l.b16 %v156
    %v196 = vunpack.c.l.b16 %v157
    %v197 = vunpack.c.l.b16 %v158
    %v198 = vunpack.c.l.b16 %v159
    %v199 = vunpack.c.l.b16 %v160
    %v200 = vunpack.c.l.b16 %v161
    %v201 = vpack.c.b16 %v186, %v185
    %v202 = vpack.c.b16 %v188, %v187
    %v203 = vpack.c.b16 %v190, %v189
    %v204 = vpack.c.b16 %v192, %v191
    %v205 = vpack.c.b16 %v194, %v193
    %v206 = vpack.c.b16 %v196, %v195
    %v207 = vpack.c.b16 %v198, %v197
    %v208 = vpack.c.b16 %v200, %v199
    %217 = vmatprep.subr.bf16.mxu0 0
    %218 = vmatpush1.bf16.msra.mxu0 %v201
    %219 = vmatprep.subr.bf16.mxu0 0
    %220 = vmatpush1.bf16.msra.mxu0 %v202
    %221 = vmatprep.subr.bf16.mxu0 0
    %222 = vmatpush1.bf16.msra.mxu0 %v203
    %223 = vmatprep.subr.bf16.mxu0 0
    %224 = vmatpush1.bf16.msra.mxu0 %v204
    %225 = vmatprep.subr.bf16.mxu0 0
    %226 = vmatpush1.bf16.msra.mxu0 %v205
    %227 = vmatprep.subr.bf16.mxu0 0
    %228 = vmatpush1.bf16.msra.mxu0 %v206
    %229 = vmatprep.subr.bf16.mxu0 0
    %230 = vmatpush1.bf16.msra.mxu0 %v207
    %231 = vmatprep.subr.bf16.mxu0 0
    %232 = vmatpush1.bf16.msra.mxu0 %v208
    %233 = vmatprep.subr.bf16.mxu0 0
    %234 = vmatpush1.bf16.msra.mxu0 0
    %235 = vmatprep.subr.bf16.mxu0 0
    %236 = vmatpush1.bf16.msra.mxu0 0
    %237 = vmatprep.subr.bf16.mxu0 0
    %238 = vmatpush1.bf16.msra.mxu0 0
    %239 = vmatprep.subr.bf16.mxu0 0
    %240 = vmatpush1.bf16.msra.mxu0 0
    %241 = vmatprep.subr.bf16.mxu0 0
    %242 = vmatpush1.bf16.msra.mxu0 0
    %243 = vmatprep.subr.bf16.mxu0 0
    %244 = vmatpush1.bf16.msra.mxu0 0
    %245 = vmatprep.subr.bf16.mxu0 0
    %246 = vmatpush1.bf16.msra.mxu0 0
    %247 = vmatprep.subr.bf16.mxu0 0
    %248 = vmatpush1.bf16.msra.mxu0 0
    %249 = vmatprep.mubr.bf16.mxu0 0
    %250 = vmatmul.mubr.bf16.gmra.mrb[0].mxu0 %v145
    %v251 = vpop.f32.mrb[0].mxu0
    %v252 = vadd.f32 %v167, %v251
    %v253 = vpop.f32.mrb[0].mxu0
    %v254 = vpop.f32.mrb[0].mxu0
    %v255 = vpop.f32.mrb[0].mxu0
    %256 = vdwg.mxu0
    %v257 = vmax.f32 %v252, 0.0
    %v258 = vpack.c.bf16 %v257, %v257
    %v259 = vld [vmem:[%s5] sm:$0xf]
    %v260 = vld [vmem:[%s5 + $0x4] sm:$0xf]
    %v261 = vld [vmem:[%s5 + $0x8] sm:$0xf]
    %v262 = vld [vmem:[%s5 + $0xc] sm:$0xf]
    %v263 = vld [vmem:[%s5 + $0x10] sm:$0xf]
    %v264 = vld [vmem:[%s5 + $0x14] sm:$0xf]
    %v265 = vld [vmem:[%s5 + $0x18] sm:$0xf]
    %v266 = vld [vmem:[%s5 + $0x1c] sm:$0xf]
    %v267 = vld [vmem:[%s5 + $0x20] sm:$0xf]
    %v268 = vld [vmem:[%s5 + $0x24] sm:$0xf]
    %v269 = vld [vmem:[%s5 + $0x28] sm:$0xf]
    %v270 = vld [vmem:[%s5 + $0x2c] sm:$0xf]
    %v271 = vld [vmem:[%s5 + $0x30] sm:$0xf]
    %v272 = vld [vmem:[%s5 + $0x34] sm:$0xf]
    %v273 = vld [vmem:[%s5 + $0x38] sm:$0xf]
    %v274 = vld [vmem:[%s5 + $0x3c] sm:$0xf]
    %v275 = vld [vmem:[%s6] sm:$0x1]
    %v277 = vlaneseq
    %v278 = vshrl.u32 %v277, 7
    %v279 = vsub.s32 0, %v278
    %v280 = vrot.slane %v275, %v279
    %v298 = vunpack.c.l.b16 %v259
    %v299 = vunpack.c.l.b16 %v260
    %v300 = vunpack.c.l.b16 %v261
    %v301 = vunpack.c.l.b16 %v262
    %v302 = vunpack.c.l.b16 %v263
    %v303 = vunpack.c.l.b16 %v264
    %v304 = vunpack.c.l.b16 %v265
    %v305 = vunpack.c.l.b16 %v266
    %v306 = vunpack.c.l.b16 %v267
    %v307 = vunpack.c.l.b16 %v268
    %v308 = vunpack.c.l.b16 %v269
    %v309 = vunpack.c.l.b16 %v270
    %v310 = vunpack.c.l.b16 %v271
    %v311 = vunpack.c.l.b16 %v272
    %v312 = vunpack.c.l.b16 %v273
    %v313 = vunpack.c.l.b16 %v274
    %v314 = vpack.c.b16 %v299, %v298
    %v315 = vpack.c.b16 %v301, %v300
    %v316 = vpack.c.b16 %v303, %v302
    %v317 = vpack.c.b16 %v305, %v304
    %v318 = vpack.c.b16 %v307, %v306
    %v319 = vpack.c.b16 %v309, %v308
    %v320 = vpack.c.b16 %v311, %v310
    %v321 = vpack.c.b16 %v313, %v312
    %330 = vmatprep.subr.bf16.mxu0 0
    %331 = vmatpush1.bf16.msra.mxu0 %v314
    %332 = vmatprep.subr.bf16.mxu0 0
    %333 = vmatpush1.bf16.msra.mxu0 %v315
    %334 = vmatprep.subr.bf16.mxu0 0
    %335 = vmatpush1.bf16.msra.mxu0 %v316
    %336 = vmatprep.subr.bf16.mxu0 0
    %337 = vmatpush1.bf16.msra.mxu0 %v317
    %338 = vmatprep.subr.bf16.mxu0 0
    %339 = vmatpush1.bf16.msra.mxu0 %v318
    %340 = vmatprep.subr.bf16.mxu0 0
    %341 = vmatpush1.bf16.msra.mxu0 %v319
    %342 = vmatprep.subr.bf16.mxu0 0
    %343 = vmatpush1.bf16.msra.mxu0 %v320
    %344 = vmatprep.subr.bf16.mxu0 0
    %345 = vmatpush1.bf16.msra.mxu0 %v321
    %346 = vmatprep.subr.bf16.mxu0 0
    %347 = vmatpush1.bf16.msra.mxu0 0
    %348 = vmatprep.subr.bf16.mxu0 0
    %349 = vmatpush1.bf16.msra.mxu0 0
    %350 = vmatprep.subr.bf16.mxu0 0
    %351 = vmatpush1.bf16.msra.mxu0 0
    %352 = vmatprep.subr.bf16.mxu0 0
    %353 = vmatpush1.bf16.msra.mxu0 0
    %354 = vmatprep.subr.bf16.mxu0 0
    %355 = vmatpush1.bf16.msra.mxu0 0
    %356 = vmatprep.subr.bf16.mxu0 0
    %357 = vmatpush1.bf16.msra.mxu0 0
    %358 = vmatprep.subr.bf16.mxu0 0
    %359 = vmatpush1.bf16.msra.mxu0 0
    %360 = vmatprep.subr.bf16.mxu0 0
    %361 = vmatpush1.bf16.msra.mxu0 0
    %362 = vmatprep.mubr.bf16.mxu0 0
    %363 = vmatmul.mubr.bf16.gmra.mrb[0].mxu0 %v258
    %v364 = vpop.f32.mrb[0].mxu0
    %v365 = vadd.f32 %v280, %v364
    %v366 = vpop.f32.mrb[0].mxu0
    %v367 = vpop.f32.mrb[0].mxu0
    %v368 = vpop.f32.mrb[0].mxu0
    %369 = vdwg.mxu0
    %370 = vst [vmem:[#allocation2] sm:$0xff] %v365
    // Predicated region
    $region30: #{mlp_forward.1} parent=1 // pred_check
      _
    $region31: #{mlp_forward.1} parent=1 // pred_check_branch
      %372 = sbr.rel (0) target = $region33
    $region32: #{mlp_forward.1} parent=1 // pred_region
      %s374 = ssub.s32 128, 128
      %375 = vsyncadd [#allocation3], %s374
      %s377 = sshll.u32 [#allocation2], 4
      %s378 = int_to_ptr.vmem [resolvable:$true] %s377
      %380 = dma.vmem_to_hbm [thread:$0]  %s378, 128, %s7, [#allocation3]
    $region33: #{mlp_forward.1} parent=1 // pred_fallthru
      _
    // Predicated region
    $region34: #{mlp_forward.1} parent=1 // pred_check
      _
    $region35: #{mlp_forward.1} parent=1 // pred_check_branch
      %382 = sbr.rel (0) target = $region37
    $region36: #{mlp_forward.1} parent=1 // pred_region
      %s384 = ssub.s32 128, 128
      %385 = vsyncadd [#allocation5], %s384
      %s387 = sshll.u32 [#allocation4], 4
      %s388 = int_to_ptr.vmem [resolvable:$true] %s387
      %390 = dma.vmem_to_hbm [thread:$0]  %s388, 128, %s8, [#allocation5]
    $region37: #{mlp_forward.1} parent=1 // pred_fallthru
      _
    // Predicated region
    $region38: #{mlp_forward.1} parent=1 // pred_check
      _
    $region39: #{mlp_forward.1} parent=1 // pred_check_branch
      %392 = sbr.rel (0) target = $region41
    $region40: #{mlp_forward.1} parent=1 // pred_region
      %393 = dma.done [#allocation3], 128
    $region41: #{mlp_forward.1} parent=1 // pred_fallthru
      _
    // Predicated region
    $region42: #{mlp_forward.1} parent=1 // pred_check
      _
    $region43: #{mlp_forward.1} parent=1 // pred_check_branch
      %395 = sbr.rel (0) target = $region45
    $region44: #{mlp_forward.1} parent=1 // pred_region
      %396 = dma.done [#allocation5], 128
    $region45: #{mlp_forward.1} parent=1 // pred_fallthru
      _
    %397 = vsyncpa [#allocation3], 1
    %398 = vsyncpa [#allocation5], 1

</llo_original>
